<compile_context>
chip_gen: v7x
topology: tpu7x:2x2x1
jax: 0.10.0
libtpu: 0.0.40
codegen_flags: <defaults>
</compile_context>

<pallas_src>
import functools

import jax
import jax.numpy as jnp
from jax import lax
from jax.experimental import pallas as pl
from jax.experimental.pallas import tpu as pltpu


def _ffn_kernel(x_ref, w1_ref, b1_ref, w2_ref, b2_ref, o_ref, *, dff):
    # x_ref: (tm, dim) bf16; w1: (dim, 2*dff) bf16; b1: (1, 2*dff) f32
    # w2:   (dff, dim) bf16; b2: (1, dim) f32;     o_ref: (tm, dim) out dtype
    x = x_ref[...]

    # Fused first linear: single MXU push, f32 accumulation, f32 bias add.
    hg = jnp.dot(x, w1_ref[...], preferred_element_type=jnp.float32) + b1_ref[...]
    h = hg[:, :dff]          # value half
    g = hg[:, dff:]          # gate half  (== chunk(2, dim=-1))

    # GEGLU: h * gelu(g), exact (erf-based) GELU to match F.gelu default.
    gelu_g = 0.5 * g * (1.0 + lax.erf(g * jnp.float32(0.7071067811865476)))
    u = (h * gelu_g).astype(w2_ref.dtype)   # back to bf16 for the second MXU matmul

    out = jnp.dot(u, w2_ref[...], preferred_element_type=jnp.float32) + b2_ref[...]
    o_ref[...] = out.astype(o_ref.dtype)


def _vmem_budget_bytes(tm, dim, dff):
    bf16, f32 = 2, 4
    # double-buffered x (bf16) + out (f32) tiles
    tiles = 2 * tm * dim * (bf16 + f32)
    # weights/biases (constant index_map, still allocated double-buffered)
    weights = 2 * ((dim * 2 * dff) * bf16 + (2 * dff) * f32
                   + (dff * dim) * bf16 + dim * f32)
    # in-kernel f32 intermediates (hg, gelu, u, out)
    interm = tm * (2 * dff + 2 * dff + dim) * f32
    est = tiles + weights + interm
    # generous headroom, clamped to [32 MiB, 64 MiB] (safe on v5e/v6e/v7x)
    return int(min(max(2 * est, 32 * 1024 * 1024), 64 * 1024 * 1024))


def feed_forward_pallas(x, params, *, tm=256):
    """x: (batch, seq, dim). params: dict with w1 (dim, 2*dff), b1 (1, 2*dff),
    w2 (dff, dim), b2 (1, dim). Returns (batch, seq, dim) in x.dtype."""
    w1, b1, w2, b2 = params["w1"], params["b1"], params["w2"], params["b2"]
    batch, seq, dim = x.shape
    dff = w2.shape[0]
    n = batch * seq

    # Pad the row count up to a multiple of tm (ragged tail handled by padding).
    n_pad = pl.cdiv(n, tm) * tm
    x2d = x.reshape(n, dim)
    if n_pad != n:
        x2d = jnp.pad(x2d, ((0, n_pad - n), (0, 0)))

    # bf16 operands for the MXU; biases stay f32 (added post-accumulation).
    x2d = x2d.astype(jnp.bfloat16)
    w1b = w1.astype(jnp.bfloat16)
    w2b = w2.astype(jnp.bfloat16)
    b1f = b1.astype(jnp.float32)
    b2f = b2.astype(jnp.float32)

    bytes_accessed = (x2d.size * 2 + n_pad * dim * x.dtype.itemsize
                      + w1b.size * 2 + w2b.size * 2 + b1f.size * 4 + b2f.size * 4)
    cost = pl.CostEstimate(
        flops=6 * n_pad * dim * dff,
        transcendentals=n_pad * dff,
        bytes_accessed=bytes_accessed,
    )

    grid = (n_pad // tm,)
    out2d = pl.pallas_call(
        functools.partial(_ffn_kernel, dff=dff),
        out_shape=jax.ShapeDtypeStruct((n_pad, dim), x.dtype),
        grid_spec=pltpu.PrefetchScalarGridSpec(
            num_scalar_prefetch=0,
            grid=grid,
            in_specs=[
                pl.BlockSpec((tm, dim), lambda i: (i, 0)),          # x rows (streamed)
                pl.BlockSpec((dim, 2 * dff), lambda i: (0, 0)),     # fused W1 (resident)
                pl.BlockSpec((1, 2 * dff), lambda i: (0, 0)),       # fused b1
                pl.BlockSpec((dff, dim), lambda i: (0, 0)),         # W2
                pl.BlockSpec((1, dim), lambda i: (0, 0)),           # b2
            ],
            out_specs=pl.BlockSpec((tm, dim), lambda i: (i, 0)),
        ),
        compiler_params=pltpu.CompilerParams(
            dimension_semantics=("parallel",),
            vmem_limit_bytes=_vmem_budget_bytes(tm, dim, dff),
        ),
        cost_estimate=cost,
    )(x2d, w1b, b1f, w2b, b2f)

    return out2d[:n].reshape(batch, seq, dim)


def init_params(key, dim, dim_feedforward):
    """Deterministic synthetic parameters matching nn.Linear shapes.

    PyTorch Linear(dim, 2*dff) has W of shape (2*dff, dim); we store the
    transposed (dim, 2*dff) layout (fused value|gate columns, matching
    chunk(2, dim=-1) on the output) and (dff, dim) for the second Linear.
    """
    dff = dim_feedforward
    k1, k2, k3, k4 = jax.random.split(key, 4)
    return {
        "w1": jax.random.normal(k1, (dim, 2 * dff), dtype=jnp.float32) * 0.05,
        "b1": jax.random.normal(k2, (1, 2 * dff), dtype=jnp.float32) * 0.05,
        "w2": jax.random.normal(k3, (dff, dim), dtype=jnp.float32) * 0.05,
        "b2": jax.random.normal(k4, (1, dim), dtype=jnp.float32) * 0.05,
    }


def feed_forward_ref(x, params):
    """Pure-JAX f32 reference matching the PyTorch module semantics."""
    dff = params["w2"].shape[0]
    hg = x @ params["w1"] + params["b1"][0]
    h, g = hg[..., :dff], hg[..., dff:]
    u = h * jax.nn.gelu(g, approximate=False)
    return u @ params["w2"] + params["b2"][0]


if __name__ == "__main__":
    batch, seq, dim, dff = 2, 8, 32, 128

    key = jax.random.PRNGKey(0)
    kx, kp = jax.random.split(key)
    x = jax.random.normal(kx, (batch, seq, dim), dtype=jnp.float32)
    params = init_params(kp, dim, dff)

    out = feed_forward_pallas(x, params)
    out = jax.block_until_ready(out)

    ref = feed_forward_ref(x, params)
    assert out.shape == (batch, seq, dim)
    # bf16 MXU operands vs f32 reference -> allow bf16-level tolerance.
    err = float(jnp.max(jnp.abs(out - ref)))
    assert jnp.allclose(out, ref, atol=1e-2, rtol=1e-2), f"mismatch vs reference (max abs err {err})"

    print("KERNEL_OK")
</pallas_src>

<mosaic_0001>
module attributes {stable_mosaic.version = 11 : i64} {
  func.func @_ffn_kernel(%arg0: i32, %arg1: memref<256x32xbf16, #tpu.memory_space<vmem>>, %arg2: memref<32x256xbf16, #tpu.memory_space<vmem>>, %arg3: memref<1x256xf32, #tpu.memory_space<vmem>>, %arg4: memref<128x32xbf16, #tpu.memory_space<vmem>>, %arg5: memref<1x32xf32, #tpu.memory_space<vmem>>, %arg6: memref<256x32xf32, #tpu.memory_space<vmem>>) attributes {dimension_semantics = [#tpu.dimension_semantics<parallel>], iteration_bounds = array<i64: 1>, scalar_prefetch = 0 : i64, scratch_operands = 0 : i64, tpu.core_type = #tpu.core_type<tc>, window_params = [{transform_indices = @transform_0, window_bounds = array<i64: 256, 32>}, {pipeline_mode = #tpu.pipeline_mode<synchronous>, transform_indices = @transform_1, window_bounds = array<i64: 32, 256>}, {pipeline_mode = #tpu.pipeline_mode<synchronous>, transform_indices = @transform_2, window_bounds = array<i64: 1, 256>}, {pipeline_mode = #tpu.pipeline_mode<synchronous>, transform_indices = @transform_3, window_bounds = array<i64: 128, 32>}, {pipeline_mode = #tpu.pipeline_mode<synchronous>, transform_indices = @transform_4, window_bounds = array<i64: 1, 32>}, {transform_indices = @transform_5, window_bounds = array<i64: 256, 32>}]} {
    %c0 = arith.constant 0 : index
    %c0_0 = arith.constant 0 : index
    %0 = vector.load %arg1[%c0, %c0_0] : memref<256x32xbf16, #tpu.memory_space<vmem>>, vector<256x32xbf16>
    %c0_1 = arith.constant 0 : index
    %c0_2 = arith.constant 0 : index
    %1 = vector.load %arg2[%c0_1, %c0_2] : memref<32x256xbf16, #tpu.memory_space<vmem>>, vector<32x256xbf16>
    %cst = arith.constant dense<0.000000e+00> : vector<256x256xf32>
    %2 = tpu.matmul %0, %1, %cst {dimension_numbers = #tpu.dot_dimension_numbers<[1], [0], [0], [1], [0, 0, 1, 1], [], []>} : vector<256x32xbf16>, vector<32x256xbf16>, vector<256x256xf32> -> vector<256x256xf32>
    %c0_3 = arith.constant 0 : index
    %c0_4 = arith.constant 0 : index
    %3 = vector.load %arg3[%c0_3, %c0_4] : memref<1x256xf32, #tpu.memory_space<vmem>>, vector<1x256xf32>
    %4 = vector.broadcast %3 : vector<1x256xf32> to vector<256x256xf32>
    %5 = arith.addf %2, %4 : vector<256x256xf32>
    %6 = vector.extract_strided_slice %5 {offsets = [0, 0], sizes = [256, 128], strides = [1, 1]} : vector<256x256xf32> to vector<256x128xf32>
    %7 = vector.extract_strided_slice %5 {offsets = [0, 128], sizes = [256, 128], strides = [1, 1]} : vector<256x256xf32> to vector<256x128xf32>
    %cst_5 = arith.constant 5.000000e-01 : f32
    %8 = vector.broadcast %cst_5 : f32 to vector<256x128xf32>
    %9 = arith.mulf %8, %7 : vector<256x128xf32>
    %cst_6 = arith.constant 0.707106769 : f32
    %10 = vector.broadcast %cst_6 : f32 to vector<256x128xf32>
    %11 = arith.mulf %7, %10 : vector<256x128xf32>
    %12 = math.erf %11 : vector<256x128xf32>
    %cst_7 = arith.constant 1.000000e+00 : f32
    %13 = vector.broadcast %cst_7 : f32 to vector<256x128xf32>
    %14 = arith.addf %13, %12 : vector<256x128xf32>
    %15 = arith.mulf %9, %14 : vector<256x128xf32>
    %16 = arith.mulf %6, %15 : vector<256x128xf32>
    %17 = arith.truncf %16 : vector<256x128xf32> to vector<256x128xbf16>
    %c0_8 = arith.constant 0 : index
    %c0_9 = arith.constant 0 : index
    %18 = vector.load %arg4[%c0_8, %c0_9] : memref<128x32xbf16, #tpu.memory_space<vmem>>, vector<128x32xbf16>
    %cst_10 = arith.constant dense<0.000000e+00> : vector<256x32xf32>
    %19 = tpu.matmul %17, %18, %cst_10 {dimension_numbers = #tpu.dot_dimension_numbers<[1], [0], [0], [1], [0, 0, 1, 1], [], []>} : vector<256x128xbf16>, vector<128x32xbf16>, vector<256x32xf32> -> vector<256x32xf32>
    %c0_11 = arith.constant 0 : index
    %c0_12 = arith.constant 0 : index
    %20 = vector.load %arg5[%c0_11, %c0_12] : memref<1x32xf32, #tpu.memory_space<vmem>>, vector<1x32xf32>
    %21 = vector.broadcast %20 : vector<1x32xf32> to vector<256x32xf32>
    %22 = arith.addf %19, %21 : vector<256x32xf32>
    %c0_13 = arith.constant 0 : index
    %c0_14 = arith.constant 0 : index
    %23 = vector.load %arg6[%c0_13, %c0_14] : memref<256x32xf32, #tpu.memory_space<vmem>>, vector<256x32xf32>
    tpu.vector_store %arg6[%c0_13, %c0_14], %22 {strides = array<i32>} : memref<256x32xf32, #tpu.memory_space<vmem>>, vector<256x32xf32>,
    return
  }
  func.func @transform_0(%arg0: i32) -> (i32, i32) {
    %c0_i32 = arith.constant 0 : i32
    %c0_i32_0 = arith.constant 0 : i32
    return %arg0, %c0_i32 : i32, i32
  }
  func.func @transform_1(%arg0: i32) -> (i32, i32) {
    %c0_i32 = arith.constant 0 : i32
    %c0_i32_0 = arith.constant 0 : i32
    %c0_i32_1 = arith.constant 0 : i32
    return %c0_i32, %c0_i32_0 : i32, i32
  }
  func.func @transform_2(%arg0: i32) -> (i32, i32) {
    %c0_i32 = arith.constant 0 : i32
    %c0_i32_0 = arith.constant 0 : i32
    %c0_i32_1 = arith.constant 0 : i32
    return %c0_i32, %c0_i32_0 : i32, i32
  }
  func.func @transform_3(%arg0: i32) -> (i32, i32) {
    %c0_i32 = arith.constant 0 : i32
    %c0_i32_0 = arith.constant 0 : i32
    %c0_i32_1 = arith.constant 0 : i32
    return %c0_i32, %c0_i32_0 : i32, i32
  }
  func.func @transform_4(%arg0: i32) -> (i32, i32) {
    %c0_i32 = arith.constant 0 : i32
    %c0_i32_0 = arith.constant 0 : i32
    %c0_i32_1 = arith.constant 0 : i32
    return %c0_i32, %c0_i32_0 : i32, i32
  }
  func.func @transform_5(%arg0: i32) -> (i32, i32) {
    %c0_i32 = arith.constant 0 : i32
    %c0_i32_0 = arith.constant 0 : i32
    return %arg0, %c0_i32 : i32, i32
  }
}

</mosaic_0001>

<llo_original>
// kernel: tpu_custom_call.1
$region0: #{tpu_custom_call.1}
  #allocation0 [shape = 'u32[]', space=smem, size = 0x4, offset = 0x4, fixed_abs, tag = 'smem constant byte address 0x4 - core index']
  #allocation1 [shape = 'u32[144,128]{1,0:T(1,128)}', space=vmem, size = 0x12000, scoped, tag = 'internal scratch']
  %s0 = inlined_call_operand.vmem [shape: bf16[256,32], index: 0, kind: input, shape index: {}]
  %s1 = inlined_call_operand.vmem [shape: bf16[32,256], index: 1, kind: input, shape index: {}]
  %s2 = inlined_call_operand.vmem [shape: f32[1,256], index: 2, kind: input, shape index: {}]
  %s3 = inlined_call_operand.vmem [shape: bf16[128,32], index: 3, kind: input, shape index: {}]
  %s4 = inlined_call_operand.vmem [shape: f32[1,32], index: 4, kind: input, shape index: {}]
  %s5 = inlined_call_operand.vmem [shape: f32[256,32], index: 5, kind: output, shape index: {}]
  %s6 = sld [smem:[#allocation0]]
  $region30: #{tpu_custom_call.1} parent=0
    _
  %s8 = ssub.s32 1, %s6
  %s9 = scalar_select 0, %s8, %s6
  // Predicated region
  $region2: #{tpu_custom_call.1} parent=0 // pred_check
    _
  $region3: #{tpu_custom_call.1} parent=0 // pred_check_branch
    %11 = sbr.rel (0) target = $region5
  $region4: #{tpu_custom_call.1} parent=0 // pred_region
    _
  $region5: #{tpu_custom_call.1} parent=0 // pred_fallthru
    _
  // Predicated region
  $region6: #{tpu_custom_call.1} parent=0 // pred_check
    _
  $region7: #{tpu_custom_call.1} parent=0 // pred_check_branch
    %13 = sbr.rel (0) target = $region9
  $region8: #{tpu_custom_call.1} parent=0 // pred_region
    _
  $region9: #{tpu_custom_call.1} parent=0 // pred_fallthru
    _
  // Predicated region
  $region10: #{tpu_custom_call.1} parent=0 // pred_check
    _
  $region11: #{tpu_custom_call.1} parent=0 // pred_check_branch
    %15 = sbr.rel (0) target = $region13
  $region12: #{tpu_custom_call.1} parent=0 // pred_region
    _
  $region13: #{tpu_custom_call.1} parent=0 // pred_fallthru
    _
  // Predicated region
  $region14: #{tpu_custom_call.1} parent=0 // pred_check
    _
  $region15: #{tpu_custom_call.1} parent=0 // pred_check_branch
    %17 = sbr.rel (0) target = $region17
  $region16: #{tpu_custom_call.1} parent=0 // pred_region
    _
  $region17: #{tpu_custom_call.1} parent=0 // pred_fallthru
    _
  // Predicated region
  $region18: #{tpu_custom_call.1} parent=0 // pred_check
    _
  $region19: #{tpu_custom_call.1} parent=0 // pred_check_branch
    %19 = sbr.rel (0) target = $region21
  $region20: #{tpu_custom_call.1} parent=0 // pred_region
    _
  $region21: #{tpu_custom_call.1} parent=0 // pred_fallthru
    _
  %v21 = vld [vmem:[%s0] sm:$0xf]
  %v22 = vld [vmem:[%s0 + $0x4] sm:$0xf]
  %v23 = vld [vmem:[%s0 + $0x8] sm:$0xf]
  %v24 = vld [vmem:[%s0 + $0xc] sm:$0xf]
  %v25 = vld [vmem:[%s0 + $0x10] sm:$0xf]
  %v26 = vld [vmem:[%s0 + $0x14] sm:$0xf]
  %v27 = vld [vmem:[%s0 + $0x18] sm:$0xf]
  %v28 = vld [vmem:[%s0 + $0x1c] sm:$0xf]
  %v29 = vld [vmem:[%s0 + $0x20] sm:$0xf]
  %v30 = vld [vmem:[%s0 + $0x24] sm:$0xf]
  %v31 = vld [vmem:[%s0 + $0x28] sm:$0xf]
  %v32 = vld [vmem:[%s0 + $0x2c] sm:$0xf]
  %v33 = vld [vmem:[%s0 + $0x30] sm:$0xf]
  %v34 = vld [vmem:[%s0 + $0x34] sm:$0xf]
  %v35 = vld [vmem:[%s0 + $0x38] sm:$0xf]
  %v36 = vld [vmem:[%s0 + $0x3c] sm:$0xf]
  %v37 = vld [vmem:[%s0 + $0x40] sm:$0xf]
  %v38 = vld [vmem:[%s0 + $0x44] sm:$0xf]
  %v39 = vld [vmem:[%s0 + $0x48] sm:$0xf]
  %v40 = vld [vmem:[%s0 + $0x4c] sm:$0xf]
  %v41 = vld [vmem:[%s0 + $0x50] sm:$0xf]
  %v42 = vld [vmem:[%s0 + $0x54] sm:$0xf]
  %v43 = vld [vmem:[%s0 + $0x58] sm:$0xf]
  %v44 = vld [vmem:[%s0 + $0x5c] sm:$0xf]
  %v45 = vld [vmem:[%s0 + $0x60] sm:$0xf]
  %v46 = vld [vmem:[%s0 + $0x64] sm:$0xf]
  %v47 = vld [vmem:[%s0 + $0x68] sm:$0xf]
  %v48 = vld [vmem:[%s0 + $0x6c] sm:$0xf]
  %v49 = vld [vmem:[%s0 + $0x70] sm:$0xf]
  %v50 = vld [vmem:[%s0 + $0x74] sm:$0xf]
  %v51 = vld [vmem:[%s0 + $0x78] sm:$0xf]
  %v52 = vld [vmem:[%s0 + $0x7c] sm:$0xf]
  %v53 = vld [vmem:[%s1] sm:$0xff]
  %v54 = vld [vmem:[%s1 + $0x8] sm:$0xff]
  %v55 = vld [vmem:[%s1 + $0x10] sm:$0xff]
  %v56 = vld [vmem:[%s1 + $0x18] sm:$0xff]
  %v57 = vld [vmem:[%s2] sm:$0x3]
  %v59 = vlaneseq
  %v60 = vshrl.u32 %v59, 7
  %v61 = vsub.s32 0, %v60
  %v62 = vrot.slane %v57, %v61
  %v63 = vlaneseq
  %v64 = vshrl.u32 %v63, 7
  %v65 = vsub.s32 1, %v64
  %v66 = vrot.slane %v57, %v65
  %v101 = vunpack.c.l.b16 %v21
  %v102 = vunpack.c.l.b16 %v22
  %v103 = vunpack.c.l.b16 %v23
  %v104 = vunpack.c.l.b16 %v24
  %v105 = vunpack.c.l.b16 %v25
  %v106 = vunpack.c.l.b16 %v26
  %v107 = vunpack.c.l.b16 %v27
  %v108 = vunpack.c.l.b16 %v28
  %v109 = vunpack.c.l.b16 %v29
  %v110 = vunpack.c.l.b16 %v30
  %v111 = vunpack.c.l.b16 %v31
  %v112 = vunpack.c.l.b16 %v32
  %v113 = vunpack.c.l.b16 %v33
  %v114 = vunpack.c.l.b16 %v34
  %v115 = vunpack.c.l.b16 %v35
  %v116 = vunpack.c.l.b16 %v36
  %v117 = vunpack.c.l.b16 %v37
  %v118 = vunpack.c.l.b16 %v38
  %v119 = vunpack.c.l.b16 %v39
  %v120 = vunpack.c.l.b16 %v40
  %v121 = vunpack.c.l.b16 %v41
  %v122 = vunpack.c.l.b16 %v42
  %v123 = vunpack.c.l.b16 %v43
  %v124 = vunpack.c.l.b16 %v44
  %v125 = vunpack.c.l.b16 %v45
  %v126 = vunpack.c.l.b16 %v46
  %v127 = vunpack.c.l.b16 %v47
  %v128 = vunpack.c.l.b16 %v48
  %v129 = vunpack.c.l.b16 %v49
  %v130 = vunpack.c.l.b16 %v50
  %v131 = vunpack.c.l.b16 %v51
  %v132 = vunpack.c.l.b16 %v52
  %v133 = vpack.c.b16 %v102, %v101
  %v134 = vpack.c.b16 %v104, %v103
  %v135 = vpack.c.b16 %v106, %v105
  %v136 = vpack.c.b16 %v108, %v107
  %v137 = vpack.c.b16 %v110, %v109
  %v138 = vpack.c.b16 %v112, %v111
  %v139 = vpack.c.b16 %v114, %v113
  %v140 = vpack.c.b16 %v116, %v115
  %v141 = vpack.c.b16 %v118, %v117
  %v142 = vpack.c.b16 %v120, %v119
  %v143 = vpack.c.b16 %v122, %v121
  %v144 = vpack.c.b16 %v124, %v123
  %v145 = vpack.c.b16 %v126, %v125
  %v146 = vpack.c.b16 %v128, %v127
  %v147 = vpack.c.b16 %v130, %v129
  %v148 = vpack.c.b16 %v132, %v131
  %v153 = vunpack.c.l.b16 %v53
  %v154 = vunpack.c.h.b16 %v53
  %v155 = vunpack.c.l.b16 %v54
  %v156 = vunpack.c.h.b16 %v54
  %v157 = vunpack.c.l.b16 %v55
  %v158 = vunpack.c.h.b16 %v55
  %v159 = vunpack.c.l.b16 %v56
  %v160 = vunpack.c.h.b16 %v56
  %v161 = vpack.c.b16 %v155, %v153
  %v162 = vpack.c.b16 %v156, %v154
  %v163 = vpack.c.b16 %v159, %v157
  %v164 = vpack.c.b16 %v160, %v158
  %vm169 = vcmask 261120
  %v171 = vsel %vm169, %v133, 0
  %v174 = vsel %vm169, %v134, 0
  %v177 = vsel %vm169, %v135, 0
  %v180 = vsel %vm169, %v136, 0
  %v183 = vsel %vm169, %v137, 0
  %v186 = vsel %vm169, %v138, 0
  %v189 = vsel %vm169, %v139, 0
  %v192 = vsel %vm169, %v140, 0
  %v195 = vsel %vm169, %v141, 0
  %v198 = vsel %vm169, %v142, 0
  %v201 = vsel %vm169, %v143, 0
  %v204 = vsel %vm169, %v144, 0
  %v207 = vsel %vm169, %v145, 0
  %v210 = vsel %vm169, %v146, 0
  %v213 = vsel %vm169, %v147, 0
  %v216 = vsel %vm169, %v148, 0
  %218 = vmatprep.subr.bf16.mxu0 %v162
  %219 = vmatpush1.bf16.msra.mxu0 %v161
  %220 = vmatprep.subr.bf16.mxu0 %v164
  %221 = vmatpush1.bf16.msra.mxu0 %v163
  %222 = vmatprep.subr.bf16.mxu0 0
  %223 = vmatpush1.bf16.msra.mxu0 0
  %224 = vmatprep.subr.bf16.mxu0 0
  %225 = vmatpush1.bf16.msra.mxu0 0
  %226 = vmatprep.subr.bf16.mxu0 0
  %227 = vmatpush1.bf16.msra.mxu0 0
  %228 = vmatprep.subr.bf16.mxu0 0
  %229 = vmatpush1.bf16.msra.mxu0 0
  %230 = vmatprep.subr.bf16.mxu0 0
  %231 = vmatpush1.bf16.msra.mxu0 0
  %232 = vmatprep.subr.bf16.mxu0 0
  %233 = vmatpush1.bf16.msra.mxu0 0
  %234 = vmatprep.subr.bf16.mxu0 0
  %235 = vmatpush1.bf16.msra.mxu0 0
  %236 = vmatprep.subr.bf16.mxu0 0
  %237 = vmatpush1.bf16.msra.mxu0 0
  %238 = vmatprep.subr.bf16.mxu0 0
  %239 = vmatpush1.bf16.msra.mxu0 0
  %240 = vmatprep.subr.bf16.mxu0 0
  %241 = vmatpush1.bf16.msra.mxu0 0
  %242 = vmatprep.subr.bf16.mxu0 0
  %243 = vmatpush1.bf16.msra.mxu0 0
  %244 = vmatprep.subr.bf16.mxu0 0
  %245 = vmatpush1.bf16.msra.mxu0 0
  %246 = vmatprep.subr.bf16.mxu0 0
  %247 = vmatpush1.bf16.msra.mxu0 0
  %248 = vmatprep.subr.bf16.mxu0 0
  %249 = vmatpush1.bf16.msra.mxu0 0
  %250 = vmatprep.mubr.bf16.mxu0 0
  %251 = vmatmul.mubr.bf16.gmra.mrb[0].mxu0 %v171
  %v252 = vpop.f32.mrb[0].mxu0
  %v253 = vadd.f32 %v62, %v252
  %v254 = vpop.f32.mrb[0].mxu0
  %v255 = vadd.f32 %v66, %v254
  %v256 = vpop.f32.mrb[0].mxu0
  %v257 = vadd.f32 %v62, %v256
  %v258 = vpop.f32.mrb[0].mxu0
  %v259 = vadd.f32 %v66, %v258
  %260 = vmatprep.mubr.bf16.mxu0 0
  %261 = vmatmul.mubr.bf16.gmra.mrb[0].mxu0 %v174
  %v262 = vpop.f32.mrb[0].mxu0
  %v263 = vadd.f32 %v62, %v262
  %v264 = vpop.f32.mrb[0].mxu0
  %v265 = vadd.f32 %v66, %v264
  %v266 = vpop.f32.mrb[0].mxu0
  %v267 = vadd.f32 %v62, %v266
  %v268 = vpop.f32.mrb[0].mxu0
  %v269 = vadd.f32 %v66, %v268
  %270 = vmatprep.mubr.bf16.mxu0 0
  %271 = vmatmul.mubr.bf16.gmra.mrb[0].mxu0 %v177
  %v272 = vpop.f32.mrb[0].mxu0
  %v273 = vadd.f32 %v62, %v272
  %v274 = vpop.f32.mrb[0].mxu0
  %v275 = vadd.f32 %v66, %v274
  %v276 = vpop.f32.mrb[0].mxu0
  %v277 = vadd.f32 %v62, %v276
  %v278 = vpop.f32.mrb[0].mxu0
  %v279 = vadd.f32 %v66, %v278
  %280 = vmatprep.mubr.bf16.mxu0 0
  %281 = vmatmul.mubr.bf16.gmra.mrb[0].mxu0 %v180
  %v282 = vpop.f32.mrb[0].mxu0
  %v283 = vadd.f32 %v62, %v282
  %v284 = vpop.f32.mrb[0].mxu0
  %v285 = vadd.f32 %v66, %v284
  %v286 = vpop.f32.mrb[0].mxu0
  %v287 = vadd.f32 %v62, %v286
  %v288 = vpop.f32.mrb[0].mxu0
  %v289 = vadd.f32 %v66, %v288
  %290 = vmatprep.mubr.bf16.mxu0 0
  %291 = vmatmul.mubr.bf16.gmra.mrb[0].mxu0 %v183
  %v292 = vpop.f32.mrb[0].mxu0
  %v293 = vadd.f32 %v62, %v292
  %v294 = vpop.f32.mrb[0].mxu0
  %v295 = vadd.f32 %v66, %v294
  %v296 = vpop.f32.mrb[0].mxu0
  %v297 = vadd.f32 %v62, %v296
  %v298 = vpop.f32.mrb[0].mxu0
  %v299 = vadd.f32 %v66, %v298
  %300 = vmatprep.mubr.bf16.mxu0 0
  %301 = vmatmul.mubr.bf16.gmra.mrb[0].mxu0 %v186
  %v302 = vpop.f32.mrb[0].mxu0
  %v303 = vadd.f32 %v62, %v302
  %v304 = vpop.f32.mrb[0].mxu0
  %v305 = vadd.f32 %v66, %v304
  %v306 = vpop.f32.mrb[0].mxu0
  %v307 = vadd.f32 %v62, %v306
  %v308 = vpop.f32.mrb[0].mxu0
  %v309 = vadd.f32 %v66, %v308
  %310 = vmatprep.mubr.bf16.mxu0 0
  %311 = vmatmul.mubr.bf16.gmra.mrb[0].mxu0 %v189
  %v312 = vpop.f32.mrb[0].mxu0
  %v313 = vadd.f32 %v62, %v312
  %v314 = vpop.f32.mrb[0].mxu0
  %v315 = vadd.f32 %v66, %v314
  %v316 = vpop.f32.mrb[0].mxu0
  %v317 = vadd.f32 %v62, %v316
  %v318 = vpop.f32.mrb[0].mxu0
  %v319 = vadd.f32 %v66, %v318
  %320 = vmatprep.mubr.bf16.mxu0 0
  %321 = vmatmul.mubr.bf16.gmra.mrb[0].mxu0 %v192
  %v322 = vpop.f32.mrb[0].mxu0
  %v323 = vadd.f32 %v62, %v322
  %v324 = vpop.f32.mrb[0].mxu0
  %v325 = vadd.f32 %v66, %v324
  %v326 = vpop.f32.mrb[0].mxu0
  %v327 = vadd.f32 %v62, %v326
  %v328 = vpop.f32.mrb[0].mxu0
  %v329 = vadd.f32 %v66, %v328
  %330 = vmatprep.mubr.bf16.mxu0 0
  %331 = vmatmul.mubr.bf16.gmra.mrb[0].mxu0 %v195
  %v332 = vpop.f32.mrb[0].mxu0
  %v333 = vadd.f32 %v62, %v332
  %v334 = vpop.f32.mrb[0].mxu0
  %v335 = vadd.f32 %v66, %v334
  %v336 = vpop.f32.mrb[0].mxu0
  %v337 = vadd.f32 %v62, %v336
  %v338 = vpop.f32.mrb[0].mxu0
  %v339 = vadd.f32 %v66, %v338
  %340 = vmatprep.mubr.bf16.mxu0 0
  %341 = vmatmul.mubr.bf16.gmra.mrb[0].mxu0 %v198
  %v342 = vpop.f32.mrb[0].mxu0
  %v343 = vadd.f32 %v62, %v342
  %v344 = vpop.f32.mrb[0].mxu0
  %v345 = vadd.f32 %v66, %v344
  %v346 = vpop.f32.mrb[0].mxu0
  %v347 = vadd.f32 %v62, %v346
  %v348 = vpop.f32.mrb[0].mxu0
  %v349 = vadd.f32 %v66, %v348
  %350 = vmatprep.mubr.bf16.mxu0 0
  %351 = vmatmul.mubr.bf16.gmra.mrb[0].mxu0 %v201
  %v352 = vpop.f32.mrb[0].mxu0
  %v353 = vadd.f32 %v62, %v352
  %v354 = vpop.f32.mrb[0].mxu0
  %v355 = vadd.f32 %v66, %v354
  %v356 = vpop.f32.mrb[0].mxu0
  %v357 = vadd.f32 %v62, %v356
  %v358 = vpop.f32.mrb[0].mxu0
  %v359 = vadd.f32 %v66, %v358
  %360 = vmatprep.mubr.bf16.mxu0 0
  %361 = vmatmul.mubr.bf16.gmra.mrb[0].mxu0 %v204
  %v362 = vpop.f32.mrb[0].mxu0
  %v363 = vadd.f32 %v62, %v362
  %v364 = vpop.f32.mrb[0].mxu0
  %v365 = vadd.f32 %v66, %v364
  %v366 = vpop.f32.mrb[0].mxu0
  %v367 = vadd.f32 %v62, %v366
  %v368 = vpop.f32.mrb[0].mxu0
  %v369 = vadd.f32 %v66, %v368
  %370 = vmatprep.mubr.bf16.mxu0 0
  %371 = vmatmul.mubr.bf16.gmra.mrb[0].mxu0 %v207
  %v372 = vpop.f32.mrb[0].mxu0
  %v373 = vadd.f32 %v62, %v372
  %v374 = vpop.f32.mrb[0].mxu0
  %v375 = vadd.f32 %v66, %v374
  %v376 = vpop.f32.mrb[0].mxu0
  %v377 = vadd.f32 %v62, %v376
  %v378 = vpop.f32.mrb[0].mxu0
  %v379 = vadd.f32 %v66, %v378
  %380 = vmatprep.mubr.bf16.mxu0 0
  %381 = vmatmul.mubr.bf16.gmra.mrb[0].mxu0 %v210
  %v382 = vpop.f32.mrb[0].mxu0
  %v383 = vadd.f32 %v62, %v382
  %v384 = vpop.f32.mrb[0].mxu0
  %v385 = vadd.f32 %v66, %v384
  %v386 = vpop.f32.mrb[0].mxu0
  %v387 = vadd.f32 %v62, %v386
  %v388 = vpop.f32.mrb[0].mxu0
  %v389 = vadd.f32 %v66, %v388
  %390 = vmatprep.mubr.bf16.mxu0 0
  %391 = vmatmul.mubr.bf16.gmra.mrb[0].mxu0 %v213
  %v392 = vpop.f32.mrb[0].mxu0
  %v393 = vadd.f32 %v62, %v392
  %v394 = vpop.f32.mrb[0].mxu0
  %v395 = vadd.f32 %v66, %v394
  %v396 = vpop.f32.mrb[0].mxu0
  %v397 = vadd.f32 %v62, %v396
  %v398 = vpop.f32.mrb[0].mxu0
  %v399 = vadd.f32 %v66, %v398
  %400 = vmatprep.mubr.bf16.mxu0 0
  %401 = vmatmul.mubr.bf16.gmra.mrb[0].mxu0 %v216
  %v402 = vpop.f32.mrb[0].mxu0
  %v403 = vadd.f32 %v62, %v402
  %v404 = vpop.f32.mrb[0].mxu0
  %v405 = vadd.f32 %v66, %v404
  %v406 = vpop.f32.mrb[0].mxu0
  %v407 = vadd.f32 %v62, %v406
  %v408 = vpop.f32.mrb[0].mxu0
  %v409 = vadd.f32 %v66, %v408
  %410 = vdwg.mxu0
  %v411 = vmul.f32 %v255, 0.5
  %v412 = vmul.f32 %v259, 0.5
  %v413 = vmul.f32 %v265, 0.5
  %v414 = vmul.f32 %v269, 0.5
  %v415 = vmul.f32 %v275, 0.5
  %v416 = vmul.f32 %v279, 0.5
  %v417 = vmul.f32 %v285, 0.5
  %v418 = vmul.f32 %v289, 0.5
  %v419 = vmul.f32 %v295, 0.5
  %v420 = vmul.f32 %v299, 0.5
  %v421 = vmul.f32 %v305, 0.5
  %v422 = vmul.f32 %v309, 0.5
  %v423 = vmul.f32 %v315, 0.5
  %v424 = vmul.f32 %v319, 0.5
  %v425 = vmul.f32 %v325, 0.5
  %v426 = vmul.f32 %v329, 0.5
  %v427 = vmul.f32 %v335, 0.5
  %v428 = vmul.f32 %v339, 0.5
  %v429 = vmul.f32 %v345, 0.5
  %v430 = vmul.f32 %v349, 0.5
  %v431 = vmul.f32 %v355, 0.5
  %v432 = vmul.f32 %v359, 0.5
  %v433 = vmul.f32 %v365, 0.5
  %v434 = vmul.f32 %v369, 0.5
  %v435 = vmul.f32 %v375, 0.5
  %v436 = vmul.f32 %v379, 0.5
  %v437 = vmul.f32 %v385, 0.5
  %v438 = vmul.f32 %v389, 0.5
  %v439 = vmul.f32 %v395, 0.5
  %v440 = vmul.f32 %v399, 0.5
  %v441 = vmul.f32 %v405, 0.5
  %v442 = vmul.f32 %v409, 0.5
  %v443 = vmul.f32 %v255, 0.70710677
  %v444 = vmul.f32 %v259, 0.70710677
  %v445 = vmul.f32 %v265, 0.70710677
  %v446 = vmul.f32 %v269, 0.70710677
  %v447 = vmul.f32 %v275, 0.70710677
  %v448 = vmul.f32 %v279, 0.70710677
  %v449 = vmul.f32 %v285, 0.70710677
  %v450 = vmul.f32 %v289, 0.70710677
  %v451 = vmul.f32 %v295, 0.70710677
  %v452 = vmul.f32 %v299, 0.70710677
  %v453 = vmul.f32 %v305, 0.70710677
  %v454 = vmul.f32 %v309, 0.70710677
  %v455 = vmul.f32 %v315, 0.70710677
  %v456 = vmul.f32 %v319, 0.70710677
  %v457 = vmul.f32 %v325, 0.70710677
  %v458 = vmul.f32 %v329, 0.70710677
  %v459 = vmul.f32 %v335, 0.70710677
  %v460 = vmul.f32 %v339, 0.70710677
  %v461 = vmul.f32 %v345, 0.70710677
  %v462 = vmul.f32 %v349, 0.70710677
  %v463 = vmul.f32 %v355, 0.70710677
  %v464 = vmul.f32 %v359, 0.70710677
  %v465 = vmul.f32 %v365, 0.70710677
  %v466 = vmul.f32 %v369, 0.70710677
  %v467 = vmul.f32 %v375, 0.70710677
  %v468 = vmul.f32 %v379, 0.70710677
  %v469 = vmul.f32 %v385, 0.70710677
  %v470 = vmul.f32 %v389, 0.70710677
  %v471 = vmul.f32 %v395, 0.70710677
  %v472 = vmul.f32 %v399, 0.70710677
  %v473 = vmul.f32 %v405, 0.70710677
  %v474 = vmul.f32 %v409, 0.70710677
  %v475 = verf.f32.pop %v443
  %v476 = verf.f32.pop %v444
  %v477 = verf.f32.pop %v445
  %v478 = verf.f32.pop %v446
  %v479 = verf.f32.pop %v447
  %v480 = verf.f32.pop %v448
  %v481 = verf.f32.pop %v449
  %v482 = verf.f32.pop %v450
  %v483 = verf.f32.pop %v451
  %v484 = verf.f32.pop %v452
  %v485 = verf.f32.pop %v453
  %v486 = verf.f32.pop %v454
  %v487 = verf.f32.pop %v455
  %v488 = verf.f32.pop %v456
  %v489 = verf.f32.pop %v457
  %v490 = verf.f32.pop %v458
  %v491 = verf.f32.pop %v459
  %v492 = verf.f32.pop %v460
  %v493 = verf.f32.pop %v461
  %v494 = verf.f32.pop %v462
  %v495 = verf.f32.pop %v463
  %v496 = verf.f32.pop %v464
  %v497 = verf.f32.pop %v465
  %v498 = verf.f32.pop %v466
  %v499 = verf.f32.pop %v467
  %v500 = verf.f32.pop %v468
  %v501 = verf.f32.pop %v469
  %v502 = verf.f32.pop %v470
  %v503 = verf.f32.pop %v471
  %v504 = verf.f32.pop %v472
  %v505 = verf.f32.pop %v473
  %v506 = verf.f32.pop %v474
  %v507 = vadd.f32 %v475, 1.0
  %v508 = vadd.f32 %v476, 1.0
  %v509 = vadd.f32 %v477, 1.0
  %v510 = vadd.f32 %v478, 1.0
  %v511 = vadd.f32 %v479, 1.0
  %v512 = vadd.f32 %v480, 1.0
  %v513 = vadd.f32 %v481, 1.0
  %v514 = vadd.f32 %v482, 1.0
  %v515 = vadd.f32 %v483, 1.0
  %v516 = vadd.f32 %v484, 1.0
  %v517 = vadd.f32 %v485, 1.0
  %v518 = vadd.f32 %v486, 1.0
  %v519 = vadd.f32 %v487, 1.0
  %v520 = vadd.f32 %v488, 1.0
  %v521 = vadd.f32 %v489, 1.0
  %v522 = vadd.f32 %v490, 1.0
  %v523 = vadd.f32 %v491, 1.0
  %v524 = vadd.f32 %v492, 1.0
  %v525 = vadd.f32 %v493, 1.0
  %v526 = vadd.f32 %v494, 1.0
  %v527 = vadd.f32 %v495, 1.0
  %v528 = vadd.f32 %v496, 1.0
  %v529 = vadd.f32 %v497, 1.0
  %v530 = vadd.f32 %v498, 1.0
  %v531 = vadd.f32 %v499, 1.0
  %v532 = vadd.f32 %v500, 1.0
  %v533 = vadd.f32 %v501, 1.0
  %v534 = vadd.f32 %v502, 1.0
  %v535 = vadd.f32 %v503, 1.0
  %v536 = vadd.f32 %v504, 1.0
  %v537 = vadd.f32 %v505, 1.0
  %v538 = vadd.f32 %v506, 1.0
  %v539 = vmul.f32 %v411, %v507
  %v540 = vmul.f32 %v412, %v508
  %v541 = vmul.f32 %v413, %v509
  %v542 = vmul.f32 %v414, %v510
  %v543 = vmul.f32 %v415, %v511
  %v544 = vmul.f32 %v416, %v512
  %v545 = vmul.f32 %v417, %v513
  %v546 = vmul.f32 %v418, %v514
  %v547 = vmul.f32 %v419, %v515
  %v548 = vmul.f32 %v420, %v516
  %v549 = vmul.f32 %v421, %v517
  %v550 = vmul.f32 %v422, %v518
  %v551 = vmul.f32 %v423, %v519
  %v552 = vmul.f32 %v424, %v520
  %v553 = vmul.f32 %v425, %v521
  %v554 = vmul.f32 %v426, %v522
  %v555 = vmul.f32 %v427, %v523
  %v556 = vmul.f32 %v428, %v524
  %v557 = vmul.f32 %v429, %v525
  %v558 = vmul.f32 %v430, %v526
  %v559 = vmul.f32 %v431, %v527
  %v560 = vmul.f32 %v432, %v528
  %v561 = vmul.f32 %v433, %v529
  %v562 = vmul.f32 %v434, %v530
  %v563 = vmul.f32 %v435, %v531
  %v564 = vmul.f32 %v436, %v532
  %v565 = vmul.f32 %v437, %v533
  %v566 = vmul.f32 %v438, %v534
  %v567 = vmul.f32 %v439, %v535
  %v568 = vmul.f32 %v440, %v536
  %v569 = vmul.f32 %v441, %v537
  %v570 = vmul.f32 %v442, %v538
  %v571 = vmul.f32 %v253, %v539
  %v572 = vmul.f32 %v257, %v540
  %v573 = vmul.f32 %v263, %v541
  %v574 = vmul.f32 %v267, %v542
  %v575 = vmul.f32 %v273, %v543
  %v576 = vmul.f32 %v277, %v544
  %v577 = vmul.f32 %v283, %v545
  %v578 = vmul.f32 %v287, %v546
  %v579 = vmul.f32 %v293, %v547
  %v580 = vmul.f32 %v297, %v548
  %v581 = vmul.f32 %v303, %v549
  %v582 = vmul.f32 %v307, %v550
  %v583 = vmul.f32 %v313, %v551
  %v584 = vmul.f32 %v317, %v552
  %v585 = vmul.f32 %v323, %v553
  %v586 = vmul.f32 %v327, %v554
  %v587 = vmul.f32 %v333, %v555
  %v588 = vmul.f32 %v337, %v556
  %v589 = vmul.f32 %v343, %v557
  %v590 = vmul.f32 %v347, %v558
  %v591 = vmul.f32 %v353, %v559
  %v592 = vmul.f32 %v357, %v560
  %v593 = vmul.f32 %v363, %v561
  %v594 = vmul.f32 %v367, %v562
  %v595 = vmul.f32 %v373, %v563
  %v596 = vmul.f32 %v377, %v564
  %v597 = vmul.f32 %v383, %v565
  %v598 = vmul.f32 %v387, %v566
  %v599 = vmul.f32 %v393, %v567
  %v600 = vmul.f32 %v397, %v568
  %v601 = vmul.f32 %v403, %v569
  %v602 = vmul.f32 %v407, %v570
  %v603 = vpack.c.bf16 %v572, %v571
  %v604 = vpack.c.bf16 %v574, %v573
  %v605 = vpack.c.bf16 %v576, %v575
  %v606 = vpack.c.bf16 %v578, %v577
  %v607 = vpack.c.bf16 %v580, %v579
  %v608 = vpack.c.bf16 %v582, %v581
  %v609 = vpack.c.bf16 %v584, %v583
  %v610 = vpack.c.bf16 %v586, %v585
  %v611 = vpack.c.bf16 %v588, %v587
  %v612 = vpack.c.bf16 %v590, %v589
  %v613 = vpack.c.bf16 %v592, %v591
  %v614 = vpack.c.bf16 %v594, %v593
  %v615 = vpack.c.bf16 %v596, %v595
  %v616 = vpack.c.bf16 %v598, %v597
  %v617 = vpack.c.bf16 %v600, %v599
  %v618 = vpack.c.bf16 %v602, %v601
  %v619 = vld [vmem:[%s3] sm:$0xf]
  %v620 = vld [vmem:[%s3 + $0x4] sm:$0xf]
  %v621 = vld [vmem:[%s3 + $0x8] sm:$0xf]
  %v622 = vld [vmem:[%s3 + $0xc] sm:$0xf]
  %v623 = vld [vmem:[%s3 + $0x10] sm:$0xf]
  %v624 = vld [vmem:[%s3 + $0x14] sm:$0xf]
  %v625 = vld [vmem:[%s3 + $0x18] sm:$0xf]
  %v626 = vld [vmem:[%s3 + $0x1c] sm:$0xf]
  %v627 = vld [vmem:[%s3 + $0x20] sm:$0xf]
  %v628 = vld [vmem:[%s3 + $0x24] sm:$0xf]
  %v629 = vld [vmem:[%s3 + $0x28] sm:$0xf]
  %v630 = vld [vmem:[%s3 + $0x2c] sm:$0xf]
  %v631 = vld [vmem:[%s3 + $0x30] sm:$0xf]
  %v632 = vld [vmem:[%s3 + $0x34] sm:$0xf]
  %v633 = vld [vmem:[%s3 + $0x38] sm:$0xf]
  %v634 = vld [vmem:[%s3 + $0x3c] sm:$0xf]
  %v635 = vld [vmem:[%s4] sm:$0x1]
  %v637 = vlaneseq
  %v638 = vshrl.u32 %v637, 7
  %v639 = vsub.s32 0, %v638
  %v640 = vrot.slane %v635, %v639
  %v658 = vunpack.c.l.b16 %v619
  %v659 = vunpack.c.l.b16 %v620
  %v660 = vunpack.c.l.b16 %v621
  %v661 = vunpack.c.l.b16 %v622
  %v662 = vunpack.c.l.b16 %v623
  %v663 = vunpack.c.l.b16 %v624
  %v664 = vunpack.c.l.b16 %v625
  %v665 = vunpack.c.l.b16 %v626
  %v666 = vunpack.c.l.b16 %v627
  %v667 = vunpack.c.l.b16 %v628
  %v668 = vunpack.c.l.b16 %v629
  %v669 = vunpack.c.l.b16 %v630
  %v670 = vunpack.c.l.b16 %v631
  %v671 = vunpack.c.l.b16 %v632
  %v672 = vunpack.c.l.b16 %v633
  %v673 = vunpack.c.l.b16 %v634
  %v674 = vpack.c.b16 %v659, %v658
  %v675 = vpack.c.b16 %v661, %v660
  %v676 = vpack.c.b16 %v663, %v662
  %v677 = vpack.c.b16 %v665, %v664
  %v678 = vpack.c.b16 %v667, %v666
  %v679 = vpack.c.b16 %v669, %v668
  %v680 = vpack.c.b16 %v671, %v670
  %v681 = vpack.c.b16 %v673, %v672
  %690 = vmatprep.subr.bf16.mxu0 0
  %691 = vmatpush1.bf16.msra.mxu0 %v674
  %692 = vmatprep.subr.bf16.mxu0 0
  %693 = vmatpush1.bf16.msra.mxu0 %v675
  %694 = vmatprep.subr.bf16.mxu0 0
  %695 = vmatpush1.bf16.msra.mxu0 %v676
  %696 = vmatprep.subr.bf16.mxu0 0
  %697 = vmatpush1.bf16.msra.mxu0 %v677
  %698 = vmatprep.subr.bf16.mxu0 0
  %699 = vmatpush1.bf16.msra.mxu0 %v678
  %700 = vmatprep.subr.bf16.mxu0 0
  %701 = vmatpush1.bf16.msra.mxu0 %v679
  %702 = vmatprep.subr.bf16.mxu0 0
  %703 = vmatpush1.bf16.msra.mxu0 %v680
  %704 = vmatprep.subr.bf16.mxu0 0
  %705 = vmatpush1.bf16.msra.mxu0 %v681
  %706 = vmatprep.subr.bf16.mxu0 0
  %707 = vmatpush1.bf16.msra.mxu0 0
  %708 = vmatprep.subr.bf16.mxu0 0
  %709 = vmatpush1.bf16.msra.mxu0 0
  %710 = vmatprep.subr.bf16.mxu0 0
  %711 = vmatpush1.bf16.msra.mxu0 0
  %712 = vmatprep.subr.bf16.mxu0 0
  %713 = vmatpush1.bf16.msra.mxu0 0
  %714 = vmatprep.subr.bf16.mxu0 0
  %715 = vmatpush1.bf16.msra.mxu0 0
  %716 = vmatprep.subr.bf16.mxu0 0
  %717 = vmatpush1.bf16.msra.mxu0 0
  %718 = vmatprep.subr.bf16.mxu0 0
  %719 = vmatpush1.bf16.msra.mxu0 0
  %720 = vmatprep.subr.bf16.mxu0 0
  %721 = vmatpush1.bf16.msra.mxu0 0
  %722 = vmatprep.mubr.bf16.mxu0 0
  %723 = vmatmul.mubr.bf16.gmra.mrb[0].mxu0 %v603
  %v724 = vpop.f32.mrb[0].mxu0
  %v725 = vadd.f32 %v640, %v724
  %v726 = vpop.f32.mrb[0].mxu0
  %v727 = vpop.f32.mrb[0].mxu0
  %v728 = vadd.f32 %v640, %v727
  %v729 = vpop.f32.mrb[0].mxu0
  %730 = vmatprep.mubr.bf16.mxu0 0
  %731 = vmatmul.mubr.bf16.gmra.mrb[0].mxu0 %v604
  %v732 = vpop.f32.mrb[0].mxu0
  %v733 = vadd.f32 %v640, %v732
  %v734 = vpop.f32.mrb[0].mxu0
  %v735 = vpop.f32.mrb[0].mxu0
  %v736 = vadd.f32 %v640, %v735
  %v737 = vpop.f32.mrb[0].mxu0
  %738 = vmatprep.mubr.bf16.mxu0 0
  %739 = vmatmul.mubr.bf16.gmra.mrb[0].mxu0 %v605
  %v740 = vpop.f32.mrb[0].mxu0
  %v741 = vadd.f32 %v640, %v740
  %v742 = vpop.f32.mrb[0].mxu0
  %v743 = vpop.f32.mrb[0].mxu0
  %v744 = vadd.f32 %v640, %v743
  %v745 = vpop.f32.mrb[0].mxu0
  %746 = vmatprep.mubr.bf16.mxu0 0
  %747 = vmatmul.mubr.bf16.gmra.mrb[0].mxu0 %v606
  %v748 = vpop.f32.mrb[0].mxu0
  %v749 = vadd.f32 %v640, %v748
  %v750 = vpop.f32.mrb[0].mxu0
  %v751 = vpop.f32.mrb[0].mxu0
  %v752 = vadd.f32 %v640, %v751
  %v753 = vpop.f32.mrb[0].mxu0
  %754 = vmatprep.mubr.bf16.mxu0 0
  %755 = vmatmul.mubr.bf16.gmra.mrb[0].mxu0 %v607
  %v756 = vpop.f32.mrb[0].mxu0
  %v757 = vadd.f32 %v640, %v756
  %v758 = vpop.f32.mrb[0].mxu0
  %v759 = vpop.f32.mrb[0].mxu0
  %v760 = vadd.f32 %v640, %v759
  %v761 = vpop.f32.mrb[0].mxu0
  %762 = vmatprep.mubr.bf16.mxu0 0
  %763 = vmatmul.mubr.bf16.gmra.mrb[0].mxu0 %v608
  %v764 = vpop.f32.mrb[0].mxu0
  %v765 = vadd.f32 %v640, %v764
  %v766 = vpop.f32.mrb[0].mxu0
  %v767 = vpop.f32.mrb[0].mxu0
  %v768 = vadd.f32 %v640, %v767
  %v769 = vpop.f32.mrb[0].mxu0
  %770 = vmatprep.mubr.bf16.mxu0 0
  %771 = vmatmul.mubr.bf16.gmra.mrb[0].mxu0 %v609
  %v772 = vpop.f32.mrb[0].mxu0
  %v773 = vadd.f32 %v640, %v772
  %v774 = vpop.f32.mrb[0].mxu0
  %v775 = vpop.f32.mrb[0].mxu0
  %v776 = vadd.f32 %v640, %v775
  %v777 = vpop.f32.mrb[0].mxu0
  %778 = vmatprep.mubr.bf16.mxu0 0
  %779 = vmatmul.mubr.bf16.gmra.mrb[0].mxu0 %v610
  %v780 = vpop.f32.mrb[0].mxu0
  %v781 = vadd.f32 %v640, %v780
  %v782 = vpop.f32.mrb[0].mxu0
  %v783 = vpop.f32.mrb[0].mxu0
  %v784 = vadd.f32 %v640, %v783
  %v785 = vpop.f32.mrb[0].mxu0
  %786 = vmatprep.mubr.bf16.mxu0 0
  %787 = vmatmul.mubr.bf16.gmra.mrb[0].mxu0 %v611
  %v788 = vpop.f32.mrb[0].mxu0
  %v789 = vadd.f32 %v640, %v788
  %v790 = vpop.f32.mrb[0].mxu0
  %v791 = vpop.f32.mrb[0].mxu0
  %v792 = vadd.f32 %v640, %v791
  %v793 = vpop.f32.mrb[0].mxu0
  %794 = vmatprep.mubr.bf16.mxu0 0
  %795 = vmatmul.mubr.bf16.gmra.mrb[0].mxu0 %v612
  %v796 = vpop.f32.mrb[0].mxu0
  %v797 = vadd.f32 %v640, %v796
  %v798 = vpop.f32.mrb[0].mxu0
  %v799 = vpop.f32.mrb[0].mxu0
  %v800 = vadd.f32 %v640, %v799
  %v801 = vpop.f32.mrb[0].mxu0
  %802 = vmatprep.mubr.bf16.mxu0 0
  %803 = vmatmul.mubr.bf16.gmra.mrb[0].mxu0 %v613
  %v804 = vpop.f32.mrb[0].mxu0
  %v805 = vadd.f32 %v640, %v804
  %v806 = vpop.f32.mrb[0].mxu0
  %v807 = vpop.f32.mrb[0].mxu0
  %v808 = vadd.f32 %v640, %v807
  %v809 = vpop.f32.mrb[0].mxu0
  %810 = vmatprep.mubr.bf16.mxu0 0
  %811 = vmatmul.mubr.bf16.gmra.mrb[0].mxu0 %v614
  %v812 = vpop.f32.mrb[0].mxu0
  %v813 = vadd.f32 %v640, %v812
  %v814 = vpop.f32.mrb[0].mxu0
  %v815 = vpop.f32.mrb[0].mxu0
  %v816 = vadd.f32 %v640, %v815
  %v817 = vpop.f32.mrb[0].mxu0
  %818 = vmatprep.mubr.bf16.mxu0 0
  %819 = vmatmul.mubr.bf16.gmra.mrb[0].mxu0 %v615
  %v820 = vpop.f32.mrb[0].mxu0
  %v821 = vadd.f32 %v640, %v820
  %v822 = vpop.f32.mrb[0].mxu0
  %v823 = vpop.f32.mrb[0].mxu0
  %v824 = vadd.f32 %v640, %v823
  %v825 = vpop.f32.mrb[0].mxu0
  %826 = vmatprep.mubr.bf16.mxu0 0
  %827 = vmatmul.mubr.bf16.gmra.mrb[0].mxu0 %v616
  %v828 = vpop.f32.mrb[0].mxu0
  %v829 = vadd.f32 %v640, %v828
  %v830 = vpop.f32.mrb[0].mxu0
  %v831 = vpop.f32.mrb[0].mxu0
  %v832 = vadd.f32 %v640, %v831
  %v833 = vpop.f32.mrb[0].mxu0
  %834 = vmatprep.mubr.bf16.mxu0 0
  %835 = vmatmul.mubr.bf16.gmra.mrb[0].mxu0 %v617
  %v836 = vpop.f32.mrb[0].mxu0
  %v837 = vadd.f32 %v640, %v836
  %v838 = vpop.f32.mrb[0].mxu0
  %v839 = vpop.f32.mrb[0].mxu0
  %v840 = vadd.f32 %v640, %v839
  %v841 = vpop.f32.mrb[0].mxu0
  %842 = vmatprep.mubr.bf16.mxu0 0
  %843 = vmatmul.mubr.bf16.gmra.mrb[0].mxu0 %v618
  %v844 = vpop.f32.mrb[0].mxu0
  %v845 = vadd.f32 %v640, %v844
  %v846 = vpop.f32.mrb[0].mxu0
  %v847 = vpop.f32.mrb[0].mxu0
  %v848 = vadd.f32 %v640, %v847
  %v849 = vpop.f32.mrb[0].mxu0
  %850 = vdwg.mxu0
  %851 = vst.msk [vmem:[%s5] sm:$0xff] %vm169, %v725
  %852 = vst.msk [vmem:[%s5 + $0x8] sm:$0xff] %vm169, %v728
  %853 = vst.msk [vmem:[%s5 + $0x10] sm:$0xff] %vm169, %v733
  %854 = vst.msk [vmem:[%s5 + $0x18] sm:$0xff] %vm169, %v736
  %855 = vst.msk [vmem:[%s5 + $0x20] sm:$0xff] %vm169, %v741
  %856 = vst.msk [vmem:[%s5 + $0x28] sm:$0xff] %vm169, %v744
  %857 = vst.msk [vmem:[%s5 + $0x30] sm:$0xff] %vm169, %v749
  %858 = vst.msk [vmem:[%s5 + $0x38] sm:$0xff] %vm169, %v752
  %859 = vst.msk [vmem:[%s5 + $0x40] sm:$0xff] %vm169, %v757
  %860 = vst.msk [vmem:[%s5 + $0x48] sm:$0xff] %vm169, %v760
  %861 = vst.msk [vmem:[%s5 + $0x50] sm:$0xff] %vm169, %v765
  %862 = vst.msk [vmem:[%s5 + $0x58] sm:$0xff] %vm169, %v768
  %863 = vst.msk [vmem:[%s5 + $0x60] sm:$0xff] %vm169, %v773
  %864 = vst.msk [vmem:[%s5 + $0x68] sm:$0xff] %vm169, %v776
  %865 = vst.msk [vmem:[%s5 + $0x70] sm:$0xff] %vm169, %v781
  %866 = vst.msk [vmem:[%s5 + $0x78] sm:$0xff] %vm169, %v784
  %867 = vst.msk [vmem:[%s5 + $0x80] sm:$0xff] %vm169, %v789
  %868 = vst.msk [vmem:[%s5 + $0x88] sm:$0xff] %vm169, %v792
  %869 = vst.msk [vmem:[%s5 + $0x90] sm:$0xff] %vm169, %v797
  %870 = vst.msk [vmem:[%s5 + $0x98] sm:$0xff] %vm169, %v800
  %871 = vst.msk [vmem:[%s5 + $0xa0] sm:$0xff] %vm169, %v805
  %872 = vst.msk [vmem:[%s5 + $0xa8] sm:$0xff] %vm169, %v808
  %873 = vst.msk [vmem:[%s5 + $0xb0] sm:$0xff] %vm169, %v813
  %874 = vst.msk [vmem:[%s5 + $0xb8] sm:$0xff] %vm169, %v816
  %875 = vst.msk [vmem:[%s5 + $0xc0] sm:$0xff] %vm169, %v821
  %876 = vst.msk [vmem:[%s5 + $0xc8] sm:$0xff] %vm169, %v824
  %877 = vst.msk [vmem:[%s5 + $0xd0] sm:$0xff] %vm169, %v829
  %878 = vst.msk [vmem:[%s5 + $0xd8] sm:$0xff] %vm169, %v832
  %879 = vst.msk [vmem:[%s5 + $0xe0] sm:$0xff] %vm169, %v837
  %880 = vst.msk [vmem:[%s5 + $0xe8] sm:$0xff] %vm169, %v840
  %881 = vst.msk [vmem:[%s5 + $0xf0] sm:$0xff] %vm169, %v845
  %882 = vst.msk [vmem:[%s5 + $0xf8] sm:$0xff] %vm169, %v848
  // Predicated region
  $region22: #{tpu_custom_call.1} parent=0 // pred_check
    _
  $region23: #{tpu_custom_call.1} parent=0 // pred_check_branch
    %884 = sbr.rel (0) target = $region25
  $region24: #{tpu_custom_call.1} parent=0 // pred_region
    _
  $region25: #{tpu_custom_call.1} parent=0 // pred_fallthru
    _
  // Predicated region
  $region26: #{tpu_custom_call.1} parent=0 // pred_check
    _
  $region27: #{tpu_custom_call.1} parent=0 // pred_check_branch
    %886 = sbr.rel (0) target = $region29
  $region28: #{tpu_custom_call.1} parent=0 // pred_region
    _
  $region29: #{tpu_custom_call.1} parent=0 // pred_fallthru
    _

</llo_original>
